<compile_context>
chip_gen: v7x
topology: tpu7x:2x2x1
jax: 0.10.0
libtpu: 0.0.40
codegen_flags: <defaults>
</compile_context>

<pallas_src>
import jax
import jax.numpy as jnp
from jax.experimental import pallas as pl
from jax.experimental.pallas import tpu as pltpu

IN_DIM = 144
HID = 128
N_ACT = 4
HEAD_OUT = 128       # lane-dense fused head: cols 0..3 actor logits, col 4 critic value
VALUE_COL = N_ACT
EPS = 1e-5


def _batchnorm_train(h, gamma, beta):
    # BatchNorm1d (training): centered formulation, gamma folded into the scale.
    d = h - jnp.mean(h, axis=0, keepdims=True)
    var = jnp.mean(d * d, axis=0, keepdims=True)
    scale = gamma * jax.lax.rsqrt(var + EPS)
    return d * scale + beta


def actor_critic_kernel(
    x_ref,
    w1_ref, g1_ref, be1_ref,
    w2_ref, g2_ref, be2_ref,
    wh_ref, bh_ref,
    out_ref,
):
    # ---- fc1 (bf16 MXU, f32 accumulate) + bn1 + relu ----
    # fc1/fc2 biases are dropped: they cancel exactly in BN mean subtraction.
    x = x_ref[...].astype(jnp.bfloat16)
    h1 = jnp.dot(x, w1_ref[...], preferred_element_type=jnp.float32)
    h1 = jnp.maximum(_batchnorm_train(h1, g1_ref[...], be1_ref[...]), 0.0)

    # ---- fc2 + bn2 + relu ----
    h2 = jnp.dot(h1.astype(jnp.bfloat16), w2_ref[...],
                 preferred_element_type=jnp.float32)
    h2 = jnp.maximum(_batchnorm_train(h2, g2_ref[...], be2_ref[...]), 0.0)

    # ---- fused actor+critic head: one lane-dense (HID, 128) matmul ----
    head = jnp.dot(h2.astype(jnp.bfloat16), wh_ref[...],
                   preferred_element_type=jnp.float32) + bh_ref[...]

    lane = jax.lax.broadcasted_iota(jnp.int32, head.shape, 1)
    actor_mask = lane < N_ACT

    # masked softmax over the 4 actor columns; lanes >= N_ACT underflow to exactly 0
    logits = jnp.where(actor_mask, head, -1e30)
    m = jnp.max(logits, axis=1, keepdims=True)
    e = jnp.exp(logits - m)
    inv = pl.reciprocal(jnp.sum(e, axis=1, keepdims=True), approx=False)
    probs = e * inv

    # single lane-dense store: [probs(0..3) | value(4) | zeros elsewhere]
    out_ref[...] = probs + jnp.where(lane == VALUE_COL, head, 0.0)


def prepare_kernel_params(params):
    """One-time (per parameter update) prep: fused lane-dense head + bf16 casts.
    Keeps the per-forward-call path free of scatter / convert ops."""
    wh = jnp.zeros((HID, HEAD_OUT), jnp.float32)
    wh = wh.at[:, :N_ACT].set(params["wa"]).at[:, VALUE_COL:VALUE_COL + 1].set(params["wc"])
    bh = jnp.zeros((1, HEAD_OUT), jnp.float32)
    bh = bh.at[:, :N_ACT].set(params["ba"]).at[:, VALUE_COL:VALUE_COL + 1].set(params["bc"])
    return dict(
        w1=params["w1"].astype(jnp.bfloat16),
        g1=params["g1"], be1=params["be1"],
        w2=params["w2"].astype(jnp.bfloat16),
        g2=params["g2"], be2=params["be2"],
        wh=wh.astype(jnp.bfloat16), bh=bh,
    )


def actor_critic_forward(x, kp):
    """x: (B, 144) float32, kp: prepare_kernel_params(...) output.
    Returns (probs (B,4), value (B,1))."""
    B = x.shape[0]

    args = (
        x,
        kp["w1"], kp["g1"], kp["be1"],
        kp["w2"], kp["g2"], kp["be2"],
        kp["wh"], kp["bh"],
    )

    vmem = pltpu.MemorySpace.VMEM
    cost = pl.CostEstimate(
        flops=2 * B * (IN_DIM * HID + HID * HID + HID * HEAD_OUT),
        transcendentals=B * HEAD_OUT,
        bytes_accessed=sum(int(a.size) * a.dtype.itemsize for a in args)
        + B * HEAD_OUT * 4,
    )

    # Whole problem is tiny -> single grid point, every operand fully VMEM-resident.
    # NOTE: if B is ever scaled to >>several-K rows (v5e 16 MiB scoped default,
    # v7x 64 MiB physical), tile the batch with a grid axis + two-pass BN stats.
    out = pl.pallas_call(
        actor_critic_kernel,
        in_specs=[pl.BlockSpec(memory_space=vmem) for _ in args],
        out_specs=pl.BlockSpec(memory_space=vmem),
        out_shape=jax.ShapeDtypeStruct((B, HEAD_OUT), jnp.float32),
        cost_estimate=cost,
    )(*args)

    return out[:, :N_ACT], out[:, VALUE_COL:VALUE_COL + 1]


def init_params(key):
    """PyTorch-style Linear init (U(-1/sqrt(fan_in), ..)); BN gamma=1, beta=0.
    Weights stored as (in, out); 1-D vectors as (1, N) for clean 2-D layout."""
    def linear(key, fan_in, fan_out):
        kw, kb = jax.random.split(key)
        bound = 1.0 / jnp.sqrt(fan_in)
        w = jax.random.uniform(kw, (fan_in, fan_out), jnp.float32, -bound, bound)
        b = jax.random.uniform(kb, (1, fan_out), jnp.float32, -bound, bound)
        return w, b

    k1, k2, k3, k4 = jax.random.split(key, 4)
    w1, b1 = linear(k1, IN_DIM, HID)
    w2, b2 = linear(k2, HID, HID)
    wa, ba = linear(k3, HID, N_ACT)
    wc, bc = linear(k4, HID, 1)
    return dict(
        w1=w1, b1=b1, g1=jnp.ones((1, HID), jnp.float32), be1=jnp.zeros((1, HID), jnp.float32),
        w2=w2, b2=b2, g2=jnp.ones((1, HID), jnp.float32), be2=jnp.zeros((1, HID), jnp.float32),
        wa=wa, ba=ba, wc=wc, bc=bc,
    )


def reference_forward_f32(x, p):
    """Original PyTorch semantics (training-mode BN) in full f32, biases included."""
    def bn(h, g, b):
        mean = jnp.mean(h, axis=0, keepdims=True)
        var = jnp.mean((h - mean) ** 2, axis=0, keepdims=True)
        return (h - mean) / jnp.sqrt(var + EPS) * g + b

    h1 = jnp.maximum(bn(x @ p["w1"] + p["b1"], p["g1"], p["be1"]), 0.0)
    h2 = jnp.maximum(bn(h1 @ p["w2"] + p["b2"], p["g2"], p["be2"]), 0.0)
    probs = jax.nn.softmax(h2 @ p["wa"] + p["ba"], axis=1)
    value = h2 @ p["wc"] + p["bc"]
    return probs, value


def reference_forward_bf16(x, p):
    """Pure-JAX reference mirroring the kernel's bf16-in / f32-accumulate matmuls
    (fc biases omitted -- they cancel in training-mode BN)."""
    def dot(a, w):
        return jnp.dot(a.astype(jnp.bfloat16), w.astype(jnp.bfloat16),
                       preferred_element_type=jnp.float32)

    def bn(h, g, b):
        d = h - jnp.mean(h, axis=0, keepdims=True)
        var = jnp.mean(d * d, axis=0, keepdims=True)
        return d * (g * jax.lax.rsqrt(var + EPS)) + b

    h1 = jnp.maximum(bn(dot(x, p["w1"]), p["g1"], p["be1"]), 0.0)
    h2 = jnp.maximum(bn(dot(h1, p["w2"]), p["g2"], p["be2"]), 0.0)
    probs = jax.nn.softmax(dot(h2, p["wa"]) + p["ba"], axis=1)
    value = dot(h2, p["wc"]) + p["bc"]
    return probs, value


if __name__ == "__main__":
    key = jax.random.PRNGKey(0)
    kx, kp = jax.random.split(key)

    B = 8  # small batch (>1 required for training-mode BatchNorm1d)
    x = jax.random.normal(kx, (B, IN_DIM), jnp.float32)
    params = init_params(kp)

    # One-time prep (head fusion + bf16 casts) outside the hot path.
    kparams = jax.block_until_ready(prepare_kernel_params(params))

    probs, value = actor_critic_forward(x, kparams)
    jax.block_until_ready((probs, value))

    # Tight check vs a pure-JAX model using the same bf16-matmul recipe.
    probs_b, value_b = reference_forward_bf16(x, params)
    assert jnp.allclose(probs, probs_b, atol=5e-3, rtol=5e-3), "bf16-matched probs mismatch"
    assert jnp.allclose(value, value_b, atol=5e-3, rtol=5e-3), "bf16-matched value mismatch"

    # Loose check vs the full-f32 PyTorch-semantics reference (bf16 MXU inputs).
    probs_f, value_f = reference_forward_f32(x, params)
    assert jnp.allclose(probs, probs_f, atol=5e-2, rtol=5e-2), "f32 probs mismatch"
    assert jnp.allclose(value, value_f, atol=5e-2, rtol=5e-2), "f32 value mismatch"
    assert jnp.allclose(jnp.sum(probs, axis=1), 1.0, atol=2e-3), "probs do not sum to 1"

    print("KERNEL_OK")
</pallas_src>

<mosaic_0001>
module attributes {stable_mosaic.version = 11 : i64} {
  func.func @actor_critic_kernel(%arg0: memref<8x144xf32, #tpu.memory_space<vmem>>, %arg1: memref<144x128xbf16, #tpu.memory_space<vmem>>, %arg2: memref<1x128xf32, #tpu.memory_space<vmem>>, %arg3: memref<1x128xf32, #tpu.memory_space<vmem>>, %arg4: memref<128x128xbf16, #tpu.memory_space<vmem>>, %arg5: memref<1x128xf32, #tpu.memory_space<vmem>>, %arg6: memref<1x128xf32, #tpu.memory_space<vmem>>, %arg7: memref<128x128xbf16, #tpu.memory_space<vmem>>, %arg8: memref<1x128xf32, #tpu.memory_space<vmem>>, %arg9: memref<8x128xf32, #tpu.memory_space<vmem>>) attributes {dimension_semantics = [], scalar_prefetch = 0 : i64, scratch_operands = 0 : i64, tpu.core_type = #tpu.core_type<tc>} {
    %c0 = arith.constant 0 : index
    %c0_0 = arith.constant 0 : index
    %0 = vector.load %arg0[%c0, %c0_0] : memref<8x144xf32, #tpu.memory_space<vmem>>, vector<8x144xf32>
    %1 = arith.truncf %0 : vector<8x144xf32> to vector<8x144xbf16>
    %c0_1 = arith.constant 0 : index
    %c0_2 = arith.constant 0 : index
    %2 = vector.load %arg1[%c0_1, %c0_2] : memref<144x128xbf16, #tpu.memory_space<vmem>>, vector<144x128xbf16>
    %cst = arith.constant dense<0.000000e+00> : vector<8x128xf32>
    %3 = tpu.matmul %1, %2, %cst {dimension_numbers = #tpu.dot_dimension_numbers<[1], [0], [0], [1], [0, 0, 1, 1], [], []>} : vector<8x144xbf16>, vector<144x128xbf16>, vector<8x128xf32> -> vector<8x128xf32>
    %c0_3 = arith.constant 0 : index
    %c0_4 = arith.constant 0 : index
    %4 = vector.load %arg2[%c0_3, %c0_4] : memref<1x128xf32, #tpu.memory_space<vmem>>, vector<1x128xf32>
    %c0_5 = arith.constant 0 : index
    %c0_6 = arith.constant 0 : index
    %5 = vector.load %arg3[%c0_5, %c0_6] : memref<1x128xf32, #tpu.memory_space<vmem>>, vector<1x128xf32>
    %cst_7 = arith.constant dense<0.000000e+00> : vector<128xf32>
    %6 = vector.multi_reduction <add>, %3, %cst_7 [0] : vector<8x128xf32> to vector<128xf32>
    %7 = vector.shape_cast %6 : vector<128xf32> to vector<1x128xf32>
    %cst_8 = arith.constant 8.000000e+00 : f32
    %8 = vector.broadcast %cst_8 : f32 to vector<1x128xf32>
    %9 = arith.divf %7, %8 : vector<1x128xf32>
    %10 = vector.broadcast %9 : vector<1x128xf32> to vector<8x128xf32>
    %11 = arith.subf %3, %10 : vector<8x128xf32>
    %12 = arith.mulf %11, %11 : vector<8x128xf32>
    %cst_9 = arith.constant dense<0.000000e+00> : vector<128xf32>
    %13 = vector.multi_reduction <add>, %12, %cst_9 [0] : vector<8x128xf32> to vector<128xf32>
    %14 = vector.shape_cast %13 : vector<128xf32> to vector<1x128xf32>
    %cst_10 = arith.constant 8.000000e+00 : f32
    %15 = vector.broadcast %cst_10 : f32 to vector<1x128xf32>
    %16 = arith.divf %14, %15 : vector<1x128xf32>
    %cst_11 = arith.constant 9.99999974E-6 : f32
    %17 = vector.broadcast %cst_11 : f32 to vector<1x128xf32>
    %18 = arith.addf %16, %17 : vector<1x128xf32>
    %19 = math.rsqrt %18 : vector<1x128xf32>
    %20 = arith.mulf %4, %19 : vector<1x128xf32>
    %21 = vector.broadcast %20 : vector<1x128xf32> to vector<8x128xf32>
    %22 = arith.mulf %11, %21 : vector<8x128xf32>
    %23 = vector.broadcast %5 : vector<1x128xf32> to vector<8x128xf32>
    %24 = arith.addf %22, %23 : vector<8x128xf32>
    %cst_12 = arith.constant 0.000000e+00 : f32
    %25 = vector.broadcast %cst_12 : f32 to vector<8x128xf32>
    %26 = arith.maximumf %24, %25 : vector<8x128xf32>
    %27 = arith.truncf %26 : vector<8x128xf32> to vector<8x128xbf16>
    %c0_13 = arith.constant 0 : index
    %c0_14 = arith.constant 0 : index
    %28 = vector.load %arg4[%c0_13, %c0_14] : memref<128x128xbf16, #tpu.memory_space<vmem>>, vector<128x128xbf16>
    %cst_15 = arith.constant dense<0.000000e+00> : vector<8x128xf32>
    %29 = tpu.matmul %27, %28, %cst_15 {dimension_numbers = #tpu.dot_dimension_numbers<[1], [0], [0], [1], [0, 0, 1, 1], [], []>} : vector<8x128xbf16>, vector<128x128xbf16>, vector<8x128xf32> -> vector<8x128xf32>
    %c0_16 = arith.constant 0 : index
    %c0_17 = arith.constant 0 : index
    %30 = vector.load %arg5[%c0_16, %c0_17] : memref<1x128xf32, #tpu.memory_space<vmem>>, vector<1x128xf32>
    %c0_18 = arith.constant 0 : index
    %c0_19 = arith.constant 0 : index
    %31 = vector.load %arg6[%c0_18, %c0_19] : memref<1x128xf32, #tpu.memory_space<vmem>>, vector<1x128xf32>
    %cst_20 = arith.constant dense<0.000000e+00> : vector<128xf32>
    %32 = vector.multi_reduction <add>, %29, %cst_20 [0] : vector<8x128xf32> to vector<128xf32>
    %33 = vector.shape_cast %32 : vector<128xf32> to vector<1x128xf32>
    %cst_21 = arith.constant 8.000000e+00 : f32
    %34 = vector.broadcast %cst_21 : f32 to vector<1x128xf32>
    %35 = arith.divf %33, %34 : vector<1x128xf32>
    %36 = vector.broadcast %35 : vector<1x128xf32> to vector<8x128xf32>
    %37 = arith.subf %29, %36 : vector<8x128xf32>
    %38 = arith.mulf %37, %37 : vector<8x128xf32>
    %cst_22 = arith.constant dense<0.000000e+00> : vector<128xf32>
    %39 = vector.multi_reduction <add>, %38, %cst_22 [0] : vector<8x128xf32> to vector<128xf32>
    %40 = vector.shape_cast %39 : vector<128xf32> to vector<1x128xf32>
    %cst_23 = arith.constant 8.000000e+00 : f32
    %41 = vector.broadcast %cst_23 : f32 to vector<1x128xf32>
    %42 = arith.divf %40, %41 : vector<1x128xf32>
    %cst_24 = arith.constant 9.99999974E-6 : f32
    %43 = vector.broadcast %cst_24 : f32 to vector<1x128xf32>
    %44 = arith.addf %42, %43 : vector<1x128xf32>
    %45 = math.rsqrt %44 : vector<1x128xf32>
    %46 = arith.mulf %30, %45 : vector<1x128xf32>
    %47 = vector.broadcast %46 : vector<1x128xf32> to vector<8x128xf32>
    %48 = arith.mulf %37, %47 : vector<8x128xf32>
    %49 = vector.broadcast %31 : vector<1x128xf32> to vector<8x128xf32>
    %50 = arith.addf %48, %49 : vector<8x128xf32>
    %cst_25 = arith.constant 0.000000e+00 : f32
    %51 = vector.broadcast %cst_25 : f32 to vector<8x128xf32>
    %52 = arith.maximumf %50, %51 : vector<8x128xf32>
    %53 = arith.truncf %52 : vector<8x128xf32> to vector<8x128xbf16>
    %c0_26 = arith.constant 0 : index
    %c0_27 = arith.constant 0 : index
    %54 = vector.load %arg7[%c0_26, %c0_27] : memref<128x128xbf16, #tpu.memory_space<vmem>>, vector<128x128xbf16>
    %cst_28 = arith.constant dense<0.000000e+00> : vector<8x128xf32>
    %55 = tpu.matmul %53, %54, %cst_28 {dimension_numbers = #tpu.dot_dimension_numbers<[1], [0], [0], [1], [0, 0, 1, 1], [], []>} : vector<8x128xbf16>, vector<128x128xbf16>, vector<8x128xf32> -> vector<8x128xf32>
    %c0_29 = arith.constant 0 : index
    %c0_30 = arith.constant 0 : index
    %56 = vector.load %arg8[%c0_29, %c0_30] : memref<1x128xf32, #tpu.memory_space<vmem>>, vector<1x128xf32>
    %57 = vector.broadcast %56 : vector<1x128xf32> to vector<8x128xf32>
    %58 = arith.addf %55, %57 : vector<8x128xf32>
    %59 = tpu.iota {dimensions = array<i32: 1>} : vector<8x128xi32>
    %c4_i32 = arith.constant 4 : i32
    %60 = vector.broadcast %c4_i32 : i32 to vector<8x128xi32>
    %61 = arith.cmpi slt, %59, %60 : vector<8x128xi32>
    %cst_31 = arith.constant -1.000000e+30 : f32
    %62 = vector.broadcast %cst_31 : f32 to vector<8x128xf32>
    %63 = arith.select %61, %58, %62 : vector<8x128xi1>, vector<8x128xf32>
    %cst_32 = arith.constant dense<0xFF800000> : vector<8xf32>
    %64 = vector.multi_reduction <maximumf>, %63, %cst_32 [1] : vector<8x128xf32> to vector<8xf32>
    %65 = vector.shape_cast %64 : vector<8xf32> to vector<8x1xf32>
    %66 = vector.broadcast %65 : vector<8x1xf32> to vector<8x128xf32>
    %67 = arith.subf %63, %66 : vector<8x128xf32>
    %68 = math.exp %67 : vector<8x128xf32>
    %cst_33 = arith.constant dense<0.000000e+00> : vector<8xf32>
    %69 = vector.multi_reduction <add>, %68, %cst_33 [1] : vector<8x128xf32> to vector<8xf32>
    %70 = vector.shape_cast %69 : vector<8xf32> to vector<8x1xf32>
    %71 = tpu.reciprocal %70 : vector<8x1xf32> -> vector<8x1xf32>
    %72 = vector.broadcast %71 : vector<8x1xf32> to vector<8x128xf32>
    %73 = arith.mulf %68, %72 : vector<8x128xf32>
    %c4_i32_34 = arith.constant 4 : i32
    %74 = vector.broadcast %c4_i32_34 : i32 to vector<8x128xi32>
    %75 = arith.cmpi eq, %59, %74 : vector<8x128xi32>
    %cst_35 = arith.constant 0.000000e+00 : f32
    %76 = vector.broadcast %cst_35 : f32 to vector<8x128xf32>
    %77 = arith.select %75, %58, %76 : vector<8x128xi1>, vector<8x128xf32>
    %78 = arith.addf %73, %77 : vector<8x128xf32>
    %c0_36 = arith.constant 0 : index
    %c0_37 = arith.constant 0 : index
    %79 = vector.load %arg9[%c0_36, %c0_37] : memref<8x128xf32, #tpu.memory_space<vmem>>, vector<8x128xf32>
    tpu.vector_store %arg9[%c0_36, %c0_37], %78 {strides = array<i32>} : memref<8x128xf32, #tpu.memory_space<vmem>>, vector<8x128xf32>,
    return
  }
}

</mosaic_0001>

<llo_original>
// kernel: tpu_custom_call.1
$region0: #{tpu_custom_call.1}
  #allocation0 [shape = 'u32[]', space=smem, size = 0x4, offset = 0x4, fixed_abs, tag = 'smem constant byte address 0x4 - core index']
  #allocation1 [shape = 'u32[144,128]{1,0:T(1,128)}', space=vmem, size = 0x12000, scoped, tag = 'internal scratch']
  %s0 = inlined_call_operand.hbm [shape: f32[8,144], index: 0, kind: input, shape index: {}]
  %s1 = inlined_call_operand.hbm [shape: bf16[144,128], index: 1, kind: input, shape index: {}]
  %s2 = inlined_call_operand.vmem [shape: f32[1,128], index: 2, kind: input, shape index: {}]
  %s3 = inlined_call_operand.vmem [shape: f32[1,128], index: 3, kind: input, shape index: {}]
  %s4 = inlined_call_operand.hbm [shape: bf16[128,128], index: 4, kind: input, shape index: {}]
  %s5 = inlined_call_operand.vmem [shape: f32[1,128], index: 5, kind: input, shape index: {}]
  %s6 = inlined_call_operand.vmem [shape: f32[1,128], index: 6, kind: input, shape index: {}]
  %s7 = inlined_call_operand.hbm [shape: bf16[128,128], index: 7, kind: input, shape index: {}]
  %s8 = inlined_call_operand.vmem [shape: f32[1,128], index: 8, kind: input, shape index: {}]
  %s9 = inlined_call_operand.hbm [shape: f32[8,128], index: 9, kind: output, shape index: {}]
  %s10 = sld [smem:[#allocation0]]
  $region62: #{tpu_custom_call.1} parent=0
    _
  %s12 = ssub.s32 1, %s10
  %s13 = scalar_select 0, %s12, %s10
  $region1: #{tpu_custom_call.1} parent=0
    #allocation2 [shape = 'u8[8192]{0}', space=vmem, size = 0x2000, scoped, tag = 'input window, operand 0, single buffered']
    #allocation3 [shape = 's32[1]{0}', space=sflag, size = 0x4, scoped, tag = 'scoped memory for tpu_custom_call.1']
    #allocation4 [shape = 's32[1]{0}', space=sflag, size = 0x4, scoped, tag = 'scoped memory for tpu_custom_call.1']
    #allocation5 [shape = 'u8[36864]{0}', space=vmem, size = 0x9000, scoped, tag = 'input window, operand 1, single buffered']
    #allocation6 [shape = 's32[1]{0}', space=sflag, size = 0x4, scoped, tag = 'scoped memory for tpu_custom_call.1']
    #allocation7 [shape = 'u8[32768]{0}', space=vmem, size = 0x8000, scoped, tag = 'input window, operand 4, single buffered']
    #allocation8 [shape = 'u8[32768]{0}', space=vmem, size = 0x8000, scoped, tag = 'input window, operand 7, single buffered']
    #allocation9 [shape = 's32[1]{0}', space=sflag, size = 0x4, scoped, tag = 'scoped memory for tpu_custom_call.1']
    #allocation10 [shape = 'u8[4096]{0}', space=vmem, size = 0x1000, scoped, tag = 'output window, operand 0, single buffered']
    %14 = vsyncpa [#allocation3], 0
    %15 = vsyncpa [#allocation6], 0
    %16 = vsyncpa [#allocation9], 0
    %17 = vsyncpa [#allocation4], 0
    // Predicated region
    $region2: #{tpu_custom_call.1} parent=1 // pred_check
      _
    $region3: #{tpu_custom_call.1} parent=1 // pred_check_branch
      %19 = sbr.rel (0) target = $region5
    $region4: #{tpu_custom_call.1} parent=1 // pred_region
      %s21 = ssub.s32 256, 256
      %22 = vsyncadd [#allocation3], %s21
      %s24 = sshll.u32 [#allocation2], 4
      %s25 = int_to_ptr.vmem [resolvable:$true] %s24
      %27 = dma.hbm_to_vmem [thread:$0]  %s0, 256, %s25, [#allocation3]
    $region5: #{tpu_custom_call.1} parent=1 // pred_fallthru
      _
    // Predicated region
    $region6: #{tpu_custom_call.1} parent=1 // pred_check
      _
    $region7: #{tpu_custom_call.1} parent=1 // pred_check_branch
      %29 = sbr.rel (0) target = $region9
    $region8: #{tpu_custom_call.1} parent=1 // pred_region
      %s31 = ssub.s32 1152, 1152
      %32 = vsyncadd [#allocation6], %s31
      %s33 = sshll.u32 [#allocation5], 4
      %s34 = int_to_ptr.vmem [resolvable:$true] %s33
      %39 = dma.hbm_to_vmem [thread:$0]  %s1, 1152, %s34, [#allocation6], 64, 64, 4
    $region9: #{tpu_custom_call.1} parent=1 // pred_fallthru
      _
    // Predicated region
    $region10: #{tpu_custom_call.1} parent=1 // pred_check
      _
    $region11: #{tpu_custom_call.1} parent=1 // pred_check_branch
      %41 = sbr.rel (0) target = $region13
    $region12: #{tpu_custom_call.1} parent=1 // pred_region
      _
    $region13: #{tpu_custom_call.1} parent=1 // pred_fallthru
      _
    // Predicated region
    $region14: #{tpu_custom_call.1} parent=1 // pred_check
      _
    $region15: #{tpu_custom_call.1} parent=1 // pred_check_branch
      %43 = sbr.rel (0) target = $region17
    $region16: #{tpu_custom_call.1} parent=1 // pred_region
      _
    $region17: #{tpu_custom_call.1} parent=1 // pred_fallthru
      _
    // Predicated region
    $region18: #{tpu_custom_call.1} parent=1 // pred_check
      _
    $region19: #{tpu_custom_call.1} parent=1 // pred_check_branch
      %45 = sbr.rel (0) target = $region21
    $region20: #{tpu_custom_call.1} parent=1 // pred_region
      %s47 = ssub.s32 1024, 1024
      %48 = vsyncadd [#allocation6], %s47
      %s49 = sshll.u32 [#allocation7], 4
      %s50 = int_to_ptr.vmem [resolvable:$true] %s49
      %55 = dma.hbm_to_vmem [thread:$0]  %s4, 1024, %s50, [#allocation6], 64, 64, 4
    $region21: #{tpu_custom_call.1} parent=1 // pred_fallthru
      _
    // Predicated region
    $region22: #{tpu_custom_call.1} parent=1 // pred_check
      _
    $region23: #{tpu_custom_call.1} parent=1 // pred_check_branch
      %57 = sbr.rel (0) target = $region25
    $region24: #{tpu_custom_call.1} parent=1 // pred_region
      _
    $region25: #{tpu_custom_call.1} parent=1 // pred_fallthru
      _
    // Predicated region
    $region26: #{tpu_custom_call.1} parent=1 // pred_check
      _
    $region27: #{tpu_custom_call.1} parent=1 // pred_check_branch
      %59 = sbr.rel (0) target = $region29
    $region28: #{tpu_custom_call.1} parent=1 // pred_region
      _
    $region29: #{tpu_custom_call.1} parent=1 // pred_fallthru
      _
    // Predicated region
    $region30: #{tpu_custom_call.1} parent=1 // pred_check
      _
    $region31: #{tpu_custom_call.1} parent=1 // pred_check_branch
      %61 = sbr.rel (0) target = $region33
    $region32: #{tpu_custom_call.1} parent=1 // pred_region
      %s63 = ssub.s32 1024, 1024
      %64 = vsyncadd [#allocation9], %s63
      %s65 = sshll.u32 [#allocation8], 4
      %s66 = int_to_ptr.vmem [resolvable:$true] %s65
      %71 = dma.hbm_to_vmem [thread:$0]  %s7, 1024, %s66, [#allocation9], 64, 64, 4
    $region33: #{tpu_custom_call.1} parent=1 // pred_fallthru
      _
    // Predicated region
    $region34: #{tpu_custom_call.1} parent=1 // pred_check
      _
    $region35: #{tpu_custom_call.1} parent=1 // pred_check_branch
      %73 = sbr.rel (0) target = $region37
    $region36: #{tpu_custom_call.1} parent=1 // pred_region
      _
    $region37: #{tpu_custom_call.1} parent=1 // pred_fallthru
      _
    // Predicated region
    $region38: #{tpu_custom_call.1} parent=1 // pred_check
      _
    $region39: #{tpu_custom_call.1} parent=1 // pred_check_branch
      %75 = sbr.rel (0) target = $region41
    $region40: #{tpu_custom_call.1} parent=1 // pred_region
      %76 = dma.done [#allocation3], 256
    $region41: #{tpu_custom_call.1} parent=1 // pred_fallthru
      _
    // Predicated region
    $region42: #{tpu_custom_call.1} parent=1 // pred_check
      _
    $region43: #{tpu_custom_call.1} parent=1 // pred_check_branch
      %78 = sbr.rel (0) target = $region45
    $region44: #{tpu_custom_call.1} parent=1 // pred_region
      %79 = dma.done [#allocation6], 1152
    $region45: #{tpu_custom_call.1} parent=1 // pred_fallthru
      _
    // Predicated region
    $region46: #{tpu_custom_call.1} parent=1 // pred_check
      _
    $region47: #{tpu_custom_call.1} parent=1 // pred_check_branch
      %81 = sbr.rel (0) target = $region49
    $region48: #{tpu_custom_call.1} parent=1 // pred_region
      %82 = dma.done [#allocation6], 1024
    $region49: #{tpu_custom_call.1} parent=1 // pred_fallthru
      _
    // Predicated region
    $region50: #{tpu_custom_call.1} parent=1 // pred_check
      _
    $region51: #{tpu_custom_call.1} parent=1 // pred_check_branch
      %84 = sbr.rel (0) target = $region53
    $region52: #{tpu_custom_call.1} parent=1 // pred_region
      %85 = dma.done [#allocation9], 1024
    $region53: #{tpu_custom_call.1} parent=1 // pred_fallthru
      _
    %v87 = vld [vmem:[#allocation2] sm:$0xff]
    %v88 = vld [vmem:[#allocation2 + $0x8] sm:$0xff]
    %v89 = vpack.c.bf16 %v87, %v87
    %v90 = vpack.c.bf16 %v88, %v88
    %v91 = vld [vmem:[#allocation5] sm:$0xf]
    %v92 = vld [vmem:[#allocation5 + $0x4] sm:$0xf]
    %v93 = vld [vmem:[#allocation5 + $0x8] sm:$0xf]
    %v94 = vld [vmem:[#allocation5 + $0xc] sm:$0xf]
    %v95 = vld [vmem:[#allocation5 + $0x10] sm:$0xf]
    %v96 = vld [vmem:[#allocation5 + $0x14] sm:$0xf]
    %v97 = vld [vmem:[#allocation5 + $0x18] sm:$0xf]
    %v98 = vld [vmem:[#allocation5 + $0x1c] sm:$0xf]
    %v99 = vld [vmem:[#allocation5 + $0x20] sm:$0xf]
    %v100 = vld [vmem:[#allocation5 + $0x24] sm:$0xf]
    %v101 = vld [vmem:[#allocation5 + $0x28] sm:$0xf]
    %v102 = vld [vmem:[#allocation5 + $0x2c] sm:$0xf]
    %v103 = vld [vmem:[#allocation5 + $0x30] sm:$0xf]
    %v104 = vld [vmem:[#allocation5 + $0x34] sm:$0xf]
    %v105 = vld [vmem:[#allocation5 + $0x38] sm:$0xf]
    %v106 = vld [vmem:[#allocation5 + $0x3c] sm:$0xf]
    %v107 = vld [vmem:[#allocation5 + $0x40] sm:$0xf]
    %v108 = vld [vmem:[#allocation5 + $0x44] sm:$0xf]
    %v127 = vunpack.c.l.b16 %v91
    %v128 = vunpack.c.l.b16 %v92
    %v129 = vunpack.c.l.b16 %v93
    %v130 = vunpack.c.l.b16 %v94
    %v131 = vunpack.c.l.b16 %v95
    %v132 = vunpack.c.l.b16 %v96
    %v133 = vunpack.c.l.b16 %v97
    %v134 = vunpack.c.l.b16 %v98
    %v135 = vunpack.c.l.b16 %v99
    %v136 = vunpack.c.l.b16 %v100
    %v137 = vunpack.c.l.b16 %v101
    %v138 = vunpack.c.l.b16 %v102
    %v139 = vunpack.c.l.b16 %v103
    %v140 = vunpack.c.l.b16 %v104
    %v141 = vunpack.c.l.b16 %v105
    %v142 = vunpack.c.l.b16 %v106
    %v143 = vunpack.c.l.b16 %v107
    %v144 = vunpack.c.l.b16 %v108
    %v145 = vpack.c.b16 %v128, %v127
    %v146 = vpack.c.b16 %v130, %v129
    %v147 = vpack.c.b16 %v132, %v131
    %v148 = vpack.c.b16 %v134, %v133
    %v149 = vpack.c.b16 %v136, %v135
    %v150 = vpack.c.b16 %v138, %v137
    %v151 = vpack.c.b16 %v140, %v139
    %v152 = vpack.c.b16 %v142, %v141
    %v153 = vpack.c.b16 %v144, %v143
    %vm163 = vcmask 130048
    %v165 = vsel %vm163, %v90, 0
    %167 = vmatprep.subr.bf16.mxu0 0
    %168 = vmatpush1.bf16.msra.mxu0 %v145
    %169 = vmatprep.subr.bf16.mxu0 0
    %170 = vmatpush1.bf16.msra.mxu0 %v146
    %171 = vmatprep.subr.bf16.mxu0 0
    %172 = vmatpush1.bf16.msra.mxu0 %v147
    %173 = vmatprep.subr.bf16.mxu0 0
    %174 = vmatpush1.bf16.msra.mxu0 %v148
    %175 = vmatprep.subr.bf16.mxu0 0
    %176 = vmatpush1.bf16.msra.mxu0 %v149
    %177 = vmatprep.subr.bf16.mxu0 0
    %178 = vmatpush1.bf16.msra.mxu0 %v150
    %179 = vmatprep.subr.bf16.mxu0 0
    %180 = vmatpush1.bf16.msra.mxu0 %v151
    %181 = vmatprep.subr.bf16.mxu0 0
    %182 = vmatpush1.bf16.msra.mxu0 %v152
    %183 = vmatprep.subr.bf16.mxu0 0
    %184 = vmatpush1.bf16.msra.mxu0 %v153
    %185 = vmatprep.subr.bf16.mxu0 0
    %186 = vmatpush1.bf16.msra.mxu0 0
    %187 = vmatprep.subr.bf16.mxu0 0
    %188 = vmatpush1.bf16.msra.mxu0 0
    %189 = vmatprep.subr.bf16.mxu0 0
    %190 = vmatpush1.bf16.msra.mxu0 0
    %191 = vmatprep.subr.bf16.mxu0 0
    %192 = vmatpush1.bf16.msra.mxu0 0
    %193 = vmatprep.subr.bf16.mxu0 0
    %194 = vmatpush1.bf16.msra.mxu0 0
    %195 = vmatprep.subr.bf16.mxu0 0
    %196 = vmatpush1.bf16.msra.mxu0 0
    %197 = vmatprep.subr.bf16.mxu0 0
    %198 = vmatpush1.bf16.msra.mxu0 0
    %199 = vmatprep.mubr.bf16.mxu0 %v165
    %200 = vmatmul.mubr.bf16.gmra.mrb[0].mxu0 %v89
    %v201 = vpop.f32.mrb[0].mxu0
    %v202 = vadd.f32 0.0, %v201
    %v203 = vpop.f32.mrb[0].mxu0
    %v204 = vpop.f32.mrb[0].mxu0
    %v205 = vpop.f32.mrb[0].mxu0
    %206 = vdwg.mxu0
    %v207 = vld [vmem:[%s2] sm:$0x1]
    %v208 = vld [vmem:[%s3] sm:$0x1]
    %v209 = vrot.slane %v202, 4
    %v210 = vadd.f32 %v202, %v209
    %v211 = vrot.slane %v210, 2
    %v212 = vadd.f32 %v210, %v211
    %v213 = vrot.slane %v212, 1
    %v214 = vadd.f32 %v212, %v213
    %v215 = vrcp.pop 8.0
    %v216 = vmul.f32 %v214, %v215
    %v217 = vsub.f32 %v202, %v216
    %v218 = vmul.f32 %v217, %v217
    %v219 = vrot.slane %v218, 4
    %v220 = vadd.f32 %v218, %v219
    %v221 = vrot.slane %v220, 2
    %v222 = vadd.f32 %v220, %v221
    %v223 = vrot.slane %v222, 1
    %v224 = vadd.f32 %v222, %v223
    %v225 = vmul.f32 %v224, %v215
    %v226 = vadd.f32 %v225, 1e-05
    %v227 = vrsqrt.pop %v226
    %v228 = vmul.f32 %v207, %v227
    %v230 = vlaneseq
    %v231 = vshrl.u32 %v230, 7
    %v232 = vsub.s32 0, %v231
    %v233 = vrot.slane %v228, %v232
    %v235 = vmul.f32 %v217, %v233
    %v237 = vlaneseq
    %v238 = vshrl.u32 %v237, 7
    %v239 = vsub.s32 0, %v238
    %v240 = vrot.slane %v208, %v239
    %v242 = vadd.f32 %v235, %v240
    %v243 = vmax.f32 %v242, 0.0
    %v244 = vpack.c.bf16 %v243, %v243
    %v245 = vld [vmem:[#allocation7] sm:$0xf]
    %v246 = vld [vmem:[#allocation7 + $0x4] sm:$0xf]
    %v247 = vld [vmem:[#allocation7 + $0x8] sm:$0xf]
    %v248 = vld [vmem:[#allocation7 + $0xc] sm:$0xf]
    %v249 = vld [vmem:[#allocation7 + $0x10] sm:$0xf]
    %v250 = vld [vmem:[#allocation7 + $0x14] sm:$0xf]
    %v251 = vld [vmem:[#allocation7 + $0x18] sm:$0xf]
    %v252 = vld [vmem:[#allocation7 + $0x1c] sm:$0xf]
    %v253 = vld [vmem:[#allocation7 + $0x20] sm:$0xf]
    %v254 = vld [vmem:[#allocation7 + $0x24] sm:$0xf]
    %v255 = vld [vmem:[#allocation7 + $0x28] sm:$0xf]
    %v256 = vld [vmem:[#allocation7 + $0x2c] sm:$0xf]
    %v257 = vld [vmem:[#allocation7 + $0x30] sm:$0xf]
    %v258 = vld [vmem:[#allocation7 + $0x34] sm:$0xf]
    %v259 = vld [vmem:[#allocation7 + $0x38] sm:$0xf]
    %v260 = vld [vmem:[#allocation7 + $0x3c] sm:$0xf]
    %v277 = vunpack.c.l.b16 %v245
    %v278 = vunpack.c.l.b16 %v246
    %v279 = vunpack.c.l.b16 %v247
    %v280 = vunpack.c.l.b16 %v248
    %v281 = vunpack.c.l.b16 %v249
    %v282 = vunpack.c.l.b16 %v250
    %v283 = vunpack.c.l.b16 %v251
    %v284 = vunpack.c.l.b16 %v252
    %v285 = vunpack.c.l.b16 %v253
    %v286 = vunpack.c.l.b16 %v254
    %v287 = vunpack.c.l.b16 %v255
    %v288 = vunpack.c.l.b16 %v256
    %v289 = vunpack.c.l.b16 %v257
    %v290 = vunpack.c.l.b16 %v258
    %v291 = vunpack.c.l.b16 %v259
    %v292 = vunpack.c.l.b16 %v260
    %v293 = vpack.c.b16 %v278, %v277
    %v294 = vpack.c.b16 %v280, %v279
    %v295 = vpack.c.b16 %v282, %v281
    %v296 = vpack.c.b16 %v284, %v283
    %v297 = vpack.c.b16 %v286, %v285
    %v298 = vpack.c.b16 %v288, %v287
    %v299 = vpack.c.b16 %v290, %v289
    %v300 = vpack.c.b16 %v292, %v291
    %309 = vmatprep.subr.bf16.mxu0 0
    %310 = vmatpush1.bf16.msra.mxu0 %v293
    %311 = vmatprep.subr.bf16.mxu0 0
    %312 = vmatpush1.bf16.msra.mxu0 %v294
    %313 = vmatprep.subr.bf16.mxu0 0
    %314 = vmatpush1.bf16.msra.mxu0 %v295
    %315 = vmatprep.subr.bf16.mxu0 0
    %316 = vmatpush1.bf16.msra.mxu0 %v296
    %317 = vmatprep.subr.bf16.mxu0 0
    %318 = vmatpush1.bf16.msra.mxu0 %v297
    %319 = vmatprep.subr.bf16.mxu0 0
    %320 = vmatpush1.bf16.msra.mxu0 %v298
    %321 = vmatprep.subr.bf16.mxu0 0
    %322 = vmatpush1.bf16.msra.mxu0 %v299
    %323 = vmatprep.subr.bf16.mxu0 0
    %324 = vmatpush1.bf16.msra.mxu0 %v300
    %325 = vmatprep.subr.bf16.mxu0 0
    %326 = vmatpush1.bf16.msra.mxu0 0
    %327 = vmatprep.subr.bf16.mxu0 0
    %328 = vmatpush1.bf16.msra.mxu0 0
    %329 = vmatprep.subr.bf16.mxu0 0
    %330 = vmatpush1.bf16.msra.mxu0 0
    %331 = vmatprep.subr.bf16.mxu0 0
    %332 = vmatpush1.bf16.msra.mxu0 0
    %333 = vmatprep.subr.bf16.mxu0 0
    %334 = vmatpush1.bf16.msra.mxu0 0
    %335 = vmatprep.subr.bf16.mxu0 0
    %336 = vmatpush1.bf16.msra.mxu0 0
    %337 = vmatprep.subr.bf16.mxu0 0
    %338 = vmatpush1.bf16.msra.mxu0 0
    %339 = vmatprep.subr.bf16.mxu0 0
    %340 = vmatpush1.bf16.msra.mxu0 0
    %341 = vmatprep.mubr.bf16.mxu0 0
    %342 = vmatmul.mubr.bf16.gmra.mrb[0].mxu0 %v244
    %v343 = vpop.f32.mrb[0].mxu0
    %v344 = vadd.f32 0.0, %v343
    %v345 = vpop.f32.mrb[0].mxu0
    %v346 = vpop.f32.mrb[0].mxu0
    %v347 = vpop.f32.mrb[0].mxu0
    %348 = vdwg.mxu0
    %v349 = vld [vmem:[%s5] sm:$0x1]
    %v350 = vld [vmem:[%s6] sm:$0x1]
    %v351 = vrot.slane %v344, 4
    %v352 = vadd.f32 %v344, %v351
    %v353 = vrot.slane %v352, 2
    %v354 = vadd.f32 %v352, %v353
    %v355 = vrot.slane %v354, 1
    %v356 = vadd.f32 %v354, %v355
    %v357 = vmul.f32 %v356, %v215
    %v358 = vsub.f32 %v344, %v357
    %v359 = vmul.f32 %v358, %v358
    %v360 = vrot.slane %v359, 4
    %v361 = vadd.f32 %v359, %v360
    %v362 = vrot.slane %v361, 2
    %v363 = vadd.f32 %v361, %v362
    %v364 = vrot.slane %v363, 1
    %v365 = vadd.f32 %v363, %v364
    %v366 = vmul.f32 %v365, %v215
    %v367 = vadd.f32 %v366, 1e-05
    %v368 = vrsqrt.pop %v367
    %v369 = vmul.f32 %v349, %v368
    %v371 = vlaneseq
    %v372 = vshrl.u32 %v371, 7
    %v373 = vsub.s32 0, %v372
    %v374 = vrot.slane %v369, %v373
    %v376 = vmul.f32 %v358, %v374
    %v378 = vlaneseq
    %v379 = vshrl.u32 %v378, 7
    %v380 = vsub.s32 0, %v379
    %v381 = vrot.slane %v350, %v380
    %v383 = vadd.f32 %v376, %v381
    %v384 = vmax.f32 %v383, 0.0
    %v385 = vpack.c.bf16 %v384, %v384
    %v386 = vld [vmem:[#allocation8] sm:$0xf]
    %v387 = vld [vmem:[#allocation8 + $0x4] sm:$0xf]
    %v388 = vld [vmem:[#allocation8 + $0x8] sm:$0xf]
    %v389 = vld [vmem:[#allocation8 + $0xc] sm:$0xf]
    %v390 = vld [vmem:[#allocation8 + $0x10] sm:$0xf]
    %v391 = vld [vmem:[#allocation8 + $0x14] sm:$0xf]
    %v392 = vld [vmem:[#allocation8 + $0x18] sm:$0xf]
    %v393 = vld [vmem:[#allocation8 + $0x1c] sm:$0xf]
    %v394 = vld [vmem:[#allocation8 + $0x20] sm:$0xf]
    %v395 = vld [vmem:[#allocation8 + $0x24] sm:$0xf]
    %v396 = vld [vmem:[#allocation8 + $0x28] sm:$0xf]
    %v397 = vld [vmem:[#allocation8 + $0x2c] sm:$0xf]
    %v398 = vld [vmem:[#allocation8 + $0x30] sm:$0xf]
    %v399 = vld [vmem:[#allocation8 + $0x34] sm:$0xf]
    %v400 = vld [vmem:[#allocation8 + $0x38] sm:$0xf]
    %v401 = vld [vmem:[#allocation8 + $0x3c] sm:$0xf]
    %v402 = vld [vmem:[%s8] sm:$0x1]
    %v404 = vlaneseq
    %v405 = vshrl.u32 %v404, 7
    %v406 = vsub.s32 0, %v405
    %v407 = vrot.slane %v402, %v406
    %v425 = vunpack.c.l.b16 %v386
    %v426 = vunpack.c.l.b16 %v387
    %v427 = vunpack.c.l.b16 %v388
    %v428 = vunpack.c.l.b16 %v389
    %v429 = vunpack.c.l.b16 %v390
    %v430 = vunpack.c.l.b16 %v391
    %v431 = vunpack.c.l.b16 %v392
    %v432 = vunpack.c.l.b16 %v393
    %v433 = vunpack.c.l.b16 %v394
    %v434 = vunpack.c.l.b16 %v395
    %v435 = vunpack.c.l.b16 %v396
    %v436 = vunpack.c.l.b16 %v397
    %v437 = vunpack.c.l.b16 %v398
    %v438 = vunpack.c.l.b16 %v399
    %v439 = vunpack.c.l.b16 %v400
    %v440 = vunpack.c.l.b16 %v401
    %v441 = vpack.c.b16 %v426, %v425
    %v442 = vpack.c.b16 %v428, %v427
    %v443 = vpack.c.b16 %v430, %v429
    %v444 = vpack.c.b16 %v432, %v431
    %v445 = vpack.c.b16 %v434, %v433
    %v446 = vpack.c.b16 %v436, %v435
    %v447 = vpack.c.b16 %v438, %v437
    %v448 = vpack.c.b16 %v440, %v439
    %457 = vmatprep.subr.bf16.mxu0 0
    %458 = vmatpush1.bf16.msra.mxu0 %v441
    %459 = vmatprep.subr.bf16.mxu0 0
    %460 = vmatpush1.bf16.msra.mxu0 %v442
    %461 = vmatprep.subr.bf16.mxu0 0
    %462 = vmatpush1.bf16.msra.mxu0 %v443
    %463 = vmatprep.subr.bf16.mxu0 0
    %464 = vmatpush1.bf16.msra.mxu0 %v444
    %465 = vmatprep.subr.bf16.mxu0 0
    %466 = vmatpush1.bf16.msra.mxu0 %v445
    %467 = vmatprep.subr.bf16.mxu0 0
    %468 = vmatpush1.bf16.msra.mxu0 %v446
    %469 = vmatprep.subr.bf16.mxu0 0
    %470 = vmatpush1.bf16.msra.mxu0 %v447
    %471 = vmatprep.subr.bf16.mxu0 0
    %472 = vmatpush1.bf16.msra.mxu0 %v448
    %473 = vmatprep.subr.bf16.mxu0 0
    %474 = vmatpush1.bf16.msra.mxu0 0
    %475 = vmatprep.subr.bf16.mxu0 0
    %476 = vmatpush1.bf16.msra.mxu0 0
    %477 = vmatprep.subr.bf16.mxu0 0
    %478 = vmatpush1.bf16.msra.mxu0 0
    %479 = vmatprep.subr.bf16.mxu0 0
    %480 = vmatpush1.bf16.msra.mxu0 0
    %481 = vmatprep.subr.bf16.mxu0 0
    %482 = vmatpush1.bf16.msra.mxu0 0
    %483 = vmatprep.subr.bf16.mxu0 0
    %484 = vmatpush1.bf16.msra.mxu0 0
    %485 = vmatprep.subr.bf16.mxu0 0
    %486 = vmatpush1.bf16.msra.mxu0 0
    %487 = vmatprep.subr.bf16.mxu0 0
    %488 = vmatpush1.bf16.msra.mxu0 0
    %489 = vmatprep.mubr.bf16.mxu0 0
    %490 = vmatmul.mubr.bf16.gmra.mrb[0].mxu0 %v385
    %v491 = vpop.f32.mrb[0].mxu0
    %v492 = vadd.f32 %v407, %v491
    %v493 = vpop.f32.mrb[0].mxu0
    %v494 = vpop.f32.mrb[0].mxu0
    %v495 = vpop.f32.mrb[0].mxu0
    %496 = vdwg.mxu0
    %v497 = vlaneseq
    %v498 = vand.u32 %v497, 127
    %vm499 = vcmp.lt.s32.totalorder %v498, 4
    %v500 = vsel %vm499, %v492, -1e+30
    %501 = vmax.xlane.f32.xlu0 %v500
    %v502 = vpop.xlane.xlu0 %501
    %v503 = vsub.f32 %v500, %v502
    %v504 = vmul.f32 %v503, 1.442695
    %v505 = vpow.pop %v504
    %506 = vadd.xlane.f32.xlu0 %v505
    %v507 = vpop.xlane.xlu0 %506
    %v508 = vrcp.pop %v507
    %v509 = vmul.f32 %v505, %v508
    %vm510 = vcmp.eq.s32.totalorder %v498, 4
    %v511 = vsel %vm510, %v492, 0.0
    %v512 = vadd.f32 %v509, %v511
    %513 = vst [vmem:[#allocation10] sm:$0xff] %v512
    // Predicated region
    $region54: #{tpu_custom_call.1} parent=1 // pred_check
      _
    $region55: #{tpu_custom_call.1} parent=1 // pred_check_branch
      %515 = sbr.rel (0) target = $region57
    $region56: #{tpu_custom_call.1} parent=1 // pred_region
      %s517 = ssub.s32 128, 128
      %518 = vsyncadd [#allocation4], %s517
      %s520 = sshll.u32 [#allocation10], 4
      %s521 = int_to_ptr.vmem [resolvable:$true] %s520
      %523 = dma.vmem_to_hbm [thread:$0]  %s521, 128, %s9, [#allocation4]
    $region57: #{tpu_custom_call.1} parent=1 // pred_fallthru
      _
    // Predicated region
    $region58: #{tpu_custom_call.1} parent=1 // pred_check
      _
    $region59: #{tpu_custom_call.1} parent=1 // pred_check_branch
      %525 = sbr.rel (0) target = $region61
    $region60: #{tpu_custom_call.1} parent=1 // pred_region
      %526 = dma.done [#allocation4], 128
    $region61: #{tpu_custom_call.1} parent=1 // pred_fallthru
      _
    %527 = vsyncpa [#allocation3], 1
    %528 = vsyncpa [#allocation6], 1
    %529 = vsyncpa [#allocation9], 1
    %530 = vsyncpa [#allocation4], 1

</llo_original>
